<compile_context>
chip_gen: v5e
topology: v5e:2x2
jax: 0.10.0
libtpu: 0.0.40
codegen_flags: <defaults>
</compile_context>

<pallas_src>
import functools
import math

import jax
import jax.numpy as jnp
from jax.experimental import pallas as pl
from jax.experimental.pallas import tpu as pltpu

LANE = 128  # TPU vreg lane width


def _round_up(x, m):
    return ((x + m - 1) // m) * m


def _actor_kernel(*refs, num_layers, action_dim, matmul_dtype):
    """One batch tile of the MLP + softmax. Weights stay VMEM-resident.

    refs = (x_ref, w0, b0, w1, b1, ..., w_{L-1}, b_{L-1}, o_ref)
    """
    x_ref = refs[0]
    o_ref = refs[-1]
    wb = refs[1:-1]

    def dense(a, w_ref, b_ref):
        # lhs/rhs are already in matmul_dtype (weights pre-cast in the wrapper);
        # accumulate in f32 on the MXU.  Bias add stays f32.
        return jnp.dot(a, w_ref[...], preferred_element_type=jnp.float32) + b_ref[...]

    # Layer 0: no activation before it.
    a = dense(x_ref[...].astype(matmul_dtype), wb[0], wb[1])
    # Subsequent layers: tanh, then linear.  On the bf16 path the tanh runs in
    # bf16 (v6e/v7x EUP supports bf16 at 2x packing) and feeds the MXU
    # directly, so there is no extra per-layer cast.
    for layer in range(1, num_layers):
        act = jnp.tanh(a.astype(matmul_dtype))
        a = dense(act, wb[2 * layer], wb[2 * layer + 1])

    logits = a  # (tb, out_pad) f32; padded lanes carry a -1e30 bias.

    # Numerically stable softmax in f32.  Padded lanes give exp() == 0, so the
    # denominator equals the unpadded softmax denominator.  Normalization is an
    # exact divide so every row sums to 1 to f32 rounding (no approx recip).
    m = jnp.max(logits, axis=-1, keepdims=True)
    e = jnp.exp(logits - m)
    denom = jnp.sum(e, axis=-1, keepdims=True)
    probs = e / denom

    # Store only the real action_dim lanes: with action_dim << 128 this cuts
    # HBM writeback ~21x and removes the wrapper-side lane slice.
    o_ref[...] = probs[:, :action_dim].astype(o_ref.dtype)


def _resident_spec(arr):
    """Full-array block mapping to block (0,...,0) for every grid step.

    Rank is bound explicitly (default arg) to avoid the late-binding closure bug.
    """
    ndim = arr.ndim
    return pl.BlockSpec(arr.shape, lambda i, _n=ndim: (0,) * _n)


@functools.partial(jax.jit, static_argnames=("batch_tile", "use_bf16_matmul"))
def actor_discrete_forward(state, params, *, batch_tile=1024, use_bf16_matmul=False):
    """state: [B, state_dim] float32; params: list of (W [in,out], b [1,out]).

    use_bf16_matmul: bf16 MXU inputs + bf16 tanh (recommended on v6e/v7x only;
    keep False on v5e, which has no bf16 VPU/EUP).  Softmax is always f32.
    """
    B, state_dim = state.shape
    action_dim = params[-1][0].shape[1]
    num_layers = len(params)

    matmul_dtype = jnp.bfloat16 if use_bf16_matmul else jnp.float32

    # ---- Pad the output layer to a lane-dense width for the in-kernel compute
    # (the store itself is unpadded).  -1e30 bias so exp() of padded lanes is 0.
    out_pad = _round_up(action_dim, LANE)
    pad = out_pad - action_dim
    w_last, b_last = params[-1]
    if pad > 0:
        w_last = jnp.concatenate(
            [w_last, jnp.zeros((w_last.shape[0], pad), dtype=w_last.dtype)], axis=-1)
        b_last = jnp.concatenate(
            [b_last, jnp.full((1, pad), -1e30, dtype=b_last.dtype)], axis=-1)
    padded_params = list(params[:-1]) + [(w_last, b_last)]

    # Pre-cast W (not biases) to the matmul dtype: no per-tile cast of the
    # VMEM-resident weights, and half the one-time weight DMA on the bf16 path.
    padded_params = [(w.astype(matmul_dtype), b.astype(jnp.float32))
                     for w, b in padded_params]

    # ---- Batch tiling: 8-aligned tiles, >= 2 grid steps when B is nontrivial
    # so v7x's second TensorCore is not idle under dimension_semantics=parallel.
    tb_cap = max(8, _round_up(batch_tile, 8))
    if B <= 16:
        tb = _round_up(B, 8)
    else:
        tb = min(tb_cap, _round_up((B + 1) // 2, 8))
    b_pad_total = _round_up(B, tb)
    if b_pad_total != B:
        # TODO(synk): for very large B, a boundary tile (pl.cdiv grid) would
        # avoid this extra read+write of state; it's a minor cost (~64 B/row).
        state = jnp.concatenate(
            [state, jnp.zeros((b_pad_total - B, state_dim), dtype=state.dtype)],
            axis=0)
    grid = (b_pad_total // tb,)

    flat = [state]
    for w, b in padded_params:
        flat.extend([w, b])

    # Only the state tile moves with the grid; weights/biases are resident.
    in_specs = [pl.BlockSpec((tb, state_dim), lambda i: (i, 0))]
    for arr in flat[1:]:
        in_specs.append(_resident_spec(arr))
    out_spec = pl.BlockSpec((tb, action_dim), lambda i: (i, 0))

    # Advisory cost estimate (memory-bound call; helps XLA schedule around it).
    layer_dims = [(int(w.shape[0]), int(w.shape[1])) for w, _ in padded_params]
    flops = 2 * b_pad_total * sum(k * n for k, n in layer_dims)
    transcendentals = b_pad_total * (sum(n for _, n in layer_dims[:-1]) + out_pad)
    bytes_accessed = (
        4 * b_pad_total * (state_dim + action_dim)
        + sum(int(w.size) * w.dtype.itemsize + int(b.size) * 4
              for w, b in padded_params))

    kernel = functools.partial(
        _actor_kernel,
        num_layers=num_layers,
        action_dim=action_dim,
        matmul_dtype=matmul_dtype,
    )

    out = pl.pallas_call(
        kernel,
        out_shape=jax.ShapeDtypeStruct((b_pad_total, action_dim), jnp.float32),
        grid=grid,
        in_specs=in_specs,
        out_specs=out_spec,
        compiler_params=pltpu.CompilerParams(
            dimension_semantics=("parallel",),   # shard batch tiles across TCs on v7x
            vmem_limit_bytes=32 * 1024 * 1024,   # headroom for large tb even on v7x/v5e
        ),
        cost_estimate=pl.CostEstimate(
            flops=flops,
            transcendentals=transcendentals,
            bytes_accessed=bytes_accessed),
    )(*flat)

    if b_pad_total != B:
        out = out[:B]
    return out


def init_params(key, state_dim, action_dim,
                hidden_layers=(64, 32, 32), output_layer_init_std=0.2):
    """Deterministic init mirroring the PyTorch module's __init__:
       hidden layers: kaiming_normal_(nonlinearity='tanh') -> std = (5/3)/sqrt(fan_in)
       output layer : normal(mean=0, std=output_layer_init_std)
       all biases zero.  Weights returned already transposed to [in, out]."""
    dims = [state_dim] + list(hidden_layers) + [action_dim]
    params = []
    keys = jax.random.split(key, len(dims) - 1)
    gain = 5.0 / 3.0  # tanh gain in PyTorch
    for i in range(len(dims) - 1):
        fan_in, fan_out = dims[i], dims[i + 1]
        if i < len(dims) - 2:
            std = gain / math.sqrt(fan_in)
        else:
            std = output_layer_init_std
        w = std * jax.random.normal(keys[i], (fan_in, fan_out), dtype=jnp.float32)
        b = jnp.zeros((1, fan_out), dtype=jnp.float32)
        params.append((w, b))
    return params


def _reference_forward(state, params):
    """Pure-JAX reference for correctness checking."""
    a = state @ params[0][0] + params[0][1]
    for w, b in params[1:]:
        a = jnp.tanh(a) @ w + b
    return jax.nn.softmax(a, axis=-1)


if __name__ == "__main__":
    key = jax.random.PRNGKey(0)
    k_x, k_p = jax.random.split(key)

    B, state_dim, action_dim = 8, 16, 6
    state = jax.random.normal(k_x, (B, state_dim), dtype=jnp.float32)
    params = init_params(k_p, state_dim, action_dim)
    ref = _reference_forward(state, params)

    # 1) f32 MXU path (exact) -- tight tolerance.
    probs = jax.block_until_ready(
        actor_discrete_forward(state, params, use_bf16_matmul=False))
    assert probs.shape == (B, action_dim)
    assert jnp.allclose(probs, ref, atol=1e-5, rtol=1e-5), "f32 path mismatch vs reference"
    assert jnp.allclose(jnp.sum(probs, axis=-1), 1.0, atol=1e-5), "f32 probs don't sum to 1"

    # 2) bf16-MXU-input fast path (v6e/v7x) -- looser value tolerance, but the
    #    f32 softmax normalization is exact, so rows still sum to 1 tightly.
    probs_bf16 = jax.block_until_ready(
        actor_discrete_forward(state, params, use_bf16_matmul=True))
    assert probs_bf16.shape == (B, action_dim)
    assert jnp.allclose(probs_bf16, ref, atol=2e-2, rtol=2e-2), "bf16 path mismatch"
    assert jnp.allclose(jnp.sum(probs_bf16, axis=-1), 1.0, atol=1e-3), "bf16 probs don't sum to 1"

    # 3) Ragged batch (not a multiple of 8) exercises the batch-pad path and the
    #    >=2-tile cap (tb < batch_tile).
    B2 = 37
    state2 = jax.random.normal(jax.random.PRNGKey(1), (B2, state_dim), dtype=jnp.float32)
    ref2 = _reference_forward(state2, params)
    probs2 = jax.block_until_ready(
        actor_discrete_forward(state2, params, use_bf16_matmul=False))
    assert probs2.shape == (B2, action_dim)
    assert jnp.allclose(probs2, ref2, atol=1e-5, rtol=1e-5), "ragged-batch mismatch"
    assert jnp.allclose(jnp.sum(probs2, axis=-1), 1.0, atol=1e-5)

    # 4) Large batch exercises the multi-tile "parallel" grid (B=1024 splits into
    #    two 512-row tiles with the default batch_tile).
    B3 = 1024
    state3 = jax.random.normal(jax.random.PRNGKey(2), (B3, state_dim), dtype=jnp.float32)
    ref3 = _reference_forward(state3, params)
    probs3 = jax.block_until_ready(
        actor_discrete_forward(state3, params, use_bf16_matmul=False))
    assert probs3.shape == (B3, action_dim)
    assert jnp.allclose(probs3, ref3, atol=1e-5, rtol=1e-5), "batched path mismatch"
    assert jnp.allclose(jnp.sum(probs3, axis=-1), 1.0, atol=1e-5)

    print("KERNEL_OK")
</pallas_src>

<mosaic_0001>
module attributes {stable_mosaic.version = 11 : i64} {
  func.func @_actor_kernel(%arg0: i32, %arg1: memref<8x16xf32, #tpu.memory_space<vmem>>, %arg2: memref<16x64xf32, #tpu.memory_space<vmem>>, %arg3: memref<1x64xf32, #tpu.memory_space<vmem>>, %arg4: memref<64x32xf32, #tpu.memory_space<vmem>>, %arg5: memref<1x32xf32, #tpu.memory_space<vmem>>, %arg6: memref<32x32xf32, #tpu.memory_space<vmem>>, %arg7: memref<1x32xf32, #tpu.memory_space<vmem>>, %arg8: memref<32x128xf32, #tpu.memory_space<vmem>>, %arg9: memref<1x128xf32, #tpu.memory_space<vmem>>, %arg10: memref<8x6xf32, #tpu.memory_space<vmem>>) attributes {dimension_semantics = [#tpu.dimension_semantics<parallel>], iteration_bounds = array<i64: 1>, scalar_prefetch = 0 : i64, scratch_operands = 0 : i64, tpu.core_type = #tpu.core_type<tc>, window_params = [{transform_indices = @transform_0, window_bounds = array<i64: 8, 16>}, {pipeline_mode = #tpu.pipeline_mode<synchronous>, transform_indices = @transform_1, window_bounds = array<i64: 16, 64>}, {pipeline_mode = #tpu.pipeline_mode<synchronous>, transform_indices = @transform_2, window_bounds = array<i64: 1, 64>}, {pipeline_mode = #tpu.pipeline_mode<synchronous>, transform_indices = @transform_3, window_bounds = array<i64: 64, 32>}, {pipeline_mode = #tpu.pipeline_mode<synchronous>, transform_indices = @transform_4, window_bounds = array<i64: 1, 32>}, {pipeline_mode = #tpu.pipeline_mode<synchronous>, transform_indices = @transform_5, window_bounds = array<i64: 32, 32>}, {pipeline_mode = #tpu.pipeline_mode<synchronous>, transform_indices = @transform_6, window_bounds = array<i64: 1, 32>}, {pipeline_mode = #tpu.pipeline_mode<synchronous>, transform_indices = @transform_7, window_bounds = array<i64: 32, 128>}, {pipeline_mode = #tpu.pipeline_mode<synchronous>, transform_indices = @transform_8, window_bounds = array<i64: 1, 128>}, {transform_indices = @transform_9, window_bounds = array<i64: 8, 6>}]} {
    %c0 = arith.constant 0 : index
    %c0_0 = arith.constant 0 : index
    %0 = vector.load %arg1[%c0, %c0_0] : memref<8x16xf32, #tpu.memory_space<vmem>>, vector<8x16xf32>
    %c0_1 = arith.constant 0 : index
    %c0_2 = arith.constant 0 : index
    %1 = vector.load %arg2[%c0_1, %c0_2] : memref<16x64xf32, #tpu.memory_space<vmem>>, vector<16x64xf32>
    %cst = arith.constant dense<0.000000e+00> : vector<8x64xf32>
    %2 = tpu.matmul %0, %1, %cst {dimension_numbers = #tpu.dot_dimension_numbers<[1], [0], [0], [1], [0, 0, 1, 1], [], []>} : vector<8x16xf32>, vector<16x64xf32>, vector<8x64xf32> -> vector<8x64xf32>
    %c0_3 = arith.constant 0 : index
    %c0_4 = arith.constant 0 : index
    %3 = vector.load %arg3[%c0_3, %c0_4] : memref<1x64xf32, #tpu.memory_space<vmem>>, vector<1x64xf32>
    %4 = vector.broadcast %3 : vector<1x64xf32> to vector<8x64xf32>
    %5 = arith.addf %2, %4 : vector<8x64xf32>
    %6 = math.tanh %5 : vector<8x64xf32>
    %c0_5 = arith.constant 0 : index
    %c0_6 = arith.constant 0 : index
    %7 = vector.load %arg4[%c0_5, %c0_6] : memref<64x32xf32, #tpu.memory_space<vmem>>, vector<64x32xf32>
    %cst_7 = arith.constant dense<0.000000e+00> : vector<8x32xf32>
    %8 = tpu.matmul %6, %7, %cst_7 {dimension_numbers = #tpu.dot_dimension_numbers<[1], [0], [0], [1], [0, 0, 1, 1], [], []>} : vector<8x64xf32>, vector<64x32xf32>, vector<8x32xf32> -> vector<8x32xf32>
    %c0_8 = arith.constant 0 : index
    %c0_9 = arith.constant 0 : index
    %9 = vector.load %arg5[%c0_8, %c0_9] : memref<1x32xf32, #tpu.memory_space<vmem>>, vector<1x32xf32>
    %10 = vector.broadcast %9 : vector<1x32xf32> to vector<8x32xf32>
    %11 = arith.addf %8, %10 : vector<8x32xf32>
    %12 = math.tanh %11 : vector<8x32xf32>
    %c0_10 = arith.constant 0 : index
    %c0_11 = arith.constant 0 : index
    %13 = vector.load %arg6[%c0_10, %c0_11] : memref<32x32xf32, #tpu.memory_space<vmem>>, vector<32x32xf32>
    %cst_12 = arith.constant dense<0.000000e+00> : vector<8x32xf32>
    %14 = tpu.matmul %12, %13, %cst_12 {dimension_numbers = #tpu.dot_dimension_numbers<[1], [0], [0], [1], [0, 0, 1, 1], [], []>} : vector<8x32xf32>, vector<32x32xf32>, vector<8x32xf32> -> vector<8x32xf32>
    %c0_13 = arith.constant 0 : index
    %c0_14 = arith.constant 0 : index
    %15 = vector.load %arg7[%c0_13, %c0_14] : memref<1x32xf32, #tpu.memory_space<vmem>>, vector<1x32xf32>
    %16 = vector.broadcast %15 : vector<1x32xf32> to vector<8x32xf32>
    %17 = arith.addf %14, %16 : vector<8x32xf32>
    %18 = math.tanh %17 : vector<8x32xf32>
    %c0_15 = arith.constant 0 : index
    %c0_16 = arith.constant 0 : index
    %19 = vector.load %arg8[%c0_15, %c0_16] : memref<32x128xf32, #tpu.memory_space<vmem>>, vector<32x128xf32>
    %cst_17 = arith.constant dense<0.000000e+00> : vector<8x128xf32>
    %20 = tpu.matmul %18, %19, %cst_17 {dimension_numbers = #tpu.dot_dimension_numbers<[1], [0], [0], [1], [0, 0, 1, 1], [], []>} : vector<8x32xf32>, vector<32x128xf32>, vector<8x128xf32> -> vector<8x128xf32>
    %c0_18 = arith.constant 0 : index
    %c0_19 = arith.constant 0 : index
    %21 = vector.load %arg9[%c0_18, %c0_19] : memref<1x128xf32, #tpu.memory_space<vmem>>, vector<1x128xf32>
    %22 = vector.broadcast %21 : vector<1x128xf32> to vector<8x128xf32>
    %23 = arith.addf %20, %22 : vector<8x128xf32>
    %cst_20 = arith.constant dense<0xFF800000> : vector<8xf32>
    %24 = vector.multi_reduction <maximumf>, %23, %cst_20 [1] : vector<8x128xf32> to vector<8xf32>
    %25 = vector.shape_cast %24 : vector<8xf32> to vector<8x1xf32>
    %26 = vector.broadcast %25 : vector<8x1xf32> to vector<8x128xf32>
    %27 = arith.subf %23, %26 : vector<8x128xf32>
    %28 = math.exp %27 : vector<8x128xf32>
    %cst_21 = arith.constant dense<0.000000e+00> : vector<8xf32>
    %29 = vector.multi_reduction <add>, %28, %cst_21 [1] : vector<8x128xf32> to vector<8xf32>
    %30 = vector.shape_cast %29 : vector<8xf32> to vector<8x1xf32>
    %31 = vector.broadcast %30 : vector<8x1xf32> to vector<8x128xf32>
    %32 = arith.divf %28, %31 : vector<8x128xf32>
    %33 = vector.extract_strided_slice %32 {offsets = [0, 0], sizes = [8, 6], strides = [1, 1]} : vector<8x128xf32> to vector<8x6xf32>
    %c0_22 = arith.constant 0 : index
    %c0_23 = arith.constant 0 : index
    %34 = vector.load %arg10[%c0_22, %c0_23] : memref<8x6xf32, #tpu.memory_space<vmem>>, vector<8x6xf32>
    tpu.vector_store %arg10[%c0_22, %c0_23], %33 {strides = array<i32>} : memref<8x6xf32, #tpu.memory_space<vmem>>, vector<8x6xf32>,
    return
  }
  func.func @transform_0(%arg0: i32) -> (i32, i32) {
    %c0_i32 = arith.constant 0 : i32
    %c0_i32_0 = arith.constant 0 : i32
    return %arg0, %c0_i32 : i32, i32
  }
  func.func @transform_1(%arg0: i32) -> (i32, i32) {
    %c0_i32 = arith.constant 0 : i32
    %c0_i32_0 = arith.constant 0 : i32
    %c0_i32_1 = arith.constant 0 : i32
    return %c0_i32, %c0_i32_0 : i32, i32
  }
  func.func @transform_2(%arg0: i32) -> (i32, i32) {
    %c0_i32 = arith.constant 0 : i32
    %c0_i32_0 = arith.constant 0 : i32
    %c0_i32_1 = arith.constant 0 : i32
    return %c0_i32, %c0_i32_0 : i32, i32
  }
  func.func @transform_3(%arg0: i32) -> (i32, i32) {
    %c0_i32 = arith.constant 0 : i32
    %c0_i32_0 = arith.constant 0 : i32
    %c0_i32_1 = arith.constant 0 : i32
    return %c0_i32, %c0_i32_0 : i32, i32
  }
  func.func @transform_4(%arg0: i32) -> (i32, i32) {
    %c0_i32 = arith.constant 0 : i32
    %c0_i32_0 = arith.constant 0 : i32
    %c0_i32_1 = arith.constant 0 : i32
    return %c0_i32, %c0_i32_0 : i32, i32
  }
  func.func @transform_5(%arg0: i32) -> (i32, i32) {
    %c0_i32 = arith.constant 0 : i32
    %c0_i32_0 = arith.constant 0 : i32
    %c0_i32_1 = arith.constant 0 : i32
    return %c0_i32, %c0_i32_0 : i32, i32
  }
  func.func @transform_6(%arg0: i32) -> (i32, i32) {
    %c0_i32 = arith.constant 0 : i32
    %c0_i32_0 = arith.constant 0 : i32
    %c0_i32_1 = arith.constant 0 : i32
    return %c0_i32, %c0_i32_0 : i32, i32
  }
  func.func @transform_7(%arg0: i32) -> (i32, i32) {
    %c0_i32 = arith.constant 0 : i32
    %c0_i32_0 = arith.constant 0 : i32
    %c0_i32_1 = arith.constant 0 : i32
    return %c0_i32, %c0_i32_0 : i32, i32
  }
  func.func @transform_8(%arg0: i32) -> (i32, i32) {
    %c0_i32 = arith.constant 0 : i32
    %c0_i32_0 = arith.constant 0 : i32
    %c0_i32_1 = arith.constant 0 : i32
    return %c0_i32, %c0_i32_0 : i32, i32
  }
  func.func @transform_9(%arg0: i32) -> (i32, i32) {
    %c0_i32 = arith.constant 0 : i32
    %c0_i32_0 = arith.constant 0 : i32
    return %arg0, %c0_i32 : i32, i32
  }
}

</mosaic_0001>

<llo_original>
// kernel: actor_discrete_forward.1
$region0: #{actor_discrete_forward.1}
  #allocation0 [shape = 'u32[]', space=smem, size = 0x4, offset = 0x4, fixed_abs, tag = 'smem constant byte address 0x4 - core index']
  #allocation1 [shape = 'u32[72,128]{1,0:T(1,128)}', space=vmem, size = 0x9000, scoped, tag = 'internal scratch']
  %s0 = inlined_call_operand.vmem [shape: f32[8,16], index: 0, kind: input, shape index: {}]
  %s1 = inlined_call_operand.vmem [shape: f32[16,64], index: 1, kind: input, shape index: {}]
  %s2 = inlined_call_operand.vmem [shape: f32[1,64], index: 2, kind: input, shape index: {}]
  %s3 = inlined_call_operand.vmem [shape: f32[64,32], index: 3, kind: input, shape index: {}]
  %s4 = inlined_call_operand.vmem [shape: f32[1,32], index: 4, kind: input, shape index: {}]
  %s5 = inlined_call_operand.vmem [shape: f32[32,32], index: 5, kind: input, shape index: {}]
  %s6 = inlined_call_operand.vmem [shape: f32[1,32], index: 6, kind: input, shape index: {}]
  %s7 = inlined_call_operand.vmem [shape: f32[32,128], index: 7, kind: input, shape index: {}]
  %s8 = inlined_call_operand.vmem [shape: f32[1,128], index: 8, kind: input, shape index: {}]
  %s9 = inlined_call_operand.hbm [shape: f32[8,6], index: 9, kind: output, shape index: {}]
  %s10 = sld [smem:[#allocation0]]
  $region46: #{actor_discrete_forward.1} parent=0
    _
  %s12 = ssub.s32 1, %s10
  %s13 = scalar_select 0, %s12, %s10
  $region1: #{actor_discrete_forward.1} parent=0
    #allocation2 [shape = 'u8[4096]{0}', space=vmem, size = 0x1000, scoped, tag = 'output window, operand 0, single buffered']
    #allocation3 [shape = 's32[1]{0}', space=sflag, size = 0x4, scoped, tag = 'scoped memory for actor_discrete_forward.1']
    %14 = vsyncpa [#allocation3], 0
    // Predicated region
    $region2: #{actor_discrete_forward.1} parent=1 // pred_check
      _
    $region3: #{actor_discrete_forward.1} parent=1 // pred_check_branch
      %16 = sbr.rel (0) target = $region5
    $region4: #{actor_discrete_forward.1} parent=1 // pred_region
      _
    $region5: #{actor_discrete_forward.1} parent=1 // pred_fallthru
      _
    // Predicated region
    $region6: #{actor_discrete_forward.1} parent=1 // pred_check
      _
    $region7: #{actor_discrete_forward.1} parent=1 // pred_check_branch
      %18 = sbr.rel (0) target = $region9
    $region8: #{actor_discrete_forward.1} parent=1 // pred_region
      _
    $region9: #{actor_discrete_forward.1} parent=1 // pred_fallthru
      _
    // Predicated region
    $region10: #{actor_discrete_forward.1} parent=1 // pred_check
      _
    $region11: #{actor_discrete_forward.1} parent=1 // pred_check_branch
      %20 = sbr.rel (0) target = $region13
    $region12: #{actor_discrete_forward.1} parent=1 // pred_region
      _
    $region13: #{actor_discrete_forward.1} parent=1 // pred_fallthru
      _
    // Predicated region
    $region14: #{actor_discrete_forward.1} parent=1 // pred_check
      _
    $region15: #{actor_discrete_forward.1} parent=1 // pred_check_branch
      %22 = sbr.rel (0) target = $region17
    $region16: #{actor_discrete_forward.1} parent=1 // pred_region
      _
    $region17: #{actor_discrete_forward.1} parent=1 // pred_fallthru
      _
    // Predicated region
    $region18: #{actor_discrete_forward.1} parent=1 // pred_check
      _
    $region19: #{actor_discrete_forward.1} parent=1 // pred_check_branch
      %24 = sbr.rel (0) target = $region21
    $region20: #{actor_discrete_forward.1} parent=1 // pred_region
      _
    $region21: #{actor_discrete_forward.1} parent=1 // pred_fallthru
      _
    // Predicated region
    $region22: #{actor_discrete_forward.1} parent=1 // pred_check
      _
    $region23: #{actor_discrete_forward.1} parent=1 // pred_check_branch
      %26 = sbr.rel (0) target = $region25
    $region24: #{actor_discrete_forward.1} parent=1 // pred_region
      _
    $region25: #{actor_discrete_forward.1} parent=1 // pred_fallthru
      _
    // Predicated region
    $region26: #{actor_discrete_forward.1} parent=1 // pred_check
      _
    $region27: #{actor_discrete_forward.1} parent=1 // pred_check_branch
      %28 = sbr.rel (0) target = $region29
    $region28: #{actor_discrete_forward.1} parent=1 // pred_region
      _
    $region29: #{actor_discrete_forward.1} parent=1 // pred_fallthru
      _
    // Predicated region
    $region30: #{actor_discrete_forward.1} parent=1 // pred_check
      _
    $region31: #{actor_discrete_forward.1} parent=1 // pred_check_branch
      %30 = sbr.rel (0) target = $region33
    $region32: #{actor_discrete_forward.1} parent=1 // pred_region
      _
    $region33: #{actor_discrete_forward.1} parent=1 // pred_fallthru
      _
    // Predicated region
    $region34: #{actor_discrete_forward.1} parent=1 // pred_check
      _
    $region35: #{actor_discrete_forward.1} parent=1 // pred_check_branch
      %32 = sbr.rel (0) target = $region37
    $region36: #{actor_discrete_forward.1} parent=1 // pred_region
      _
    $region37: #{actor_discrete_forward.1} parent=1 // pred_fallthru
      _
    %v33 = vld [vmem:[%s0] sm:$0xff]
    %v34 = vld [vmem:[%s1] sm:$0xff]
    %v35 = vld [vmem:[%s1 + $0x8] sm:$0xff]
    %v36 = vld [vmem:[%s2] sm:$0x1]
    %v38 = vperm.slane %v36, 0
    %vm40 = vcmask 130048
    %v42 = vsel %vm40, %v33, 0
    %44 = vmatpush.msra.mxu0 0.0
    %45 = vmatpush.msra.mxu0 0.0
    %46 = vmatpush.msra.mxu0 0.0
    %47 = vmatpush.msra.mxu0 0.0
    %48 = vmatpush.msra.mxu0 0.0
    %49 = vmatpush.msra.mxu0 0.0
    %50 = vmatpush.msra.mxu0 0.0
    %51 = vmatpush.msra.mxu0 0.0
    %52 = vmatpush.msra.mxu0 0.0
    %53 = vmatpush.msra.mxu0 0.0
    %54 = vmatpush.msra.mxu0 0.0
    %55 = vmatpush.msra.mxu0 0.0
    %56 = vmatpush.msra.mxu0 0.0
    %57 = vmatpush.msra.mxu0 0.0
    %58 = vmatpush.msra.mxu0 %v35
    %59 = vmatpush.msra.mxu0 %v34
    %60 = vmatmul.f32.gmra.mxu0 %v42
    %v61 = vpop.f32.mrf.mxu0
    %v62 = vadd.f32 %v38, %v61
    %63 = vdwg.mxu0
    %v64 = vtanh.pop %v62
    %v65 = vld [vmem:[%s3] sm:$0xff]
    %v66 = vld [vmem:[%s3 + $0x8] sm:$0xff]
    %v67 = vld [vmem:[%s3 + $0x10] sm:$0xff]
    %v68 = vld [vmem:[%s3 + $0x18] sm:$0xff]
    %v69 = vld [vmem:[%s3 + $0x20] sm:$0xff]
    %v70 = vld [vmem:[%s3 + $0x28] sm:$0xff]
    %v71 = vld [vmem:[%s3 + $0x30] sm:$0xff]
    %v72 = vld [vmem:[%s3 + $0x38] sm:$0xff]
    %v73 = vld [vmem:[%s4] sm:$0x1]
    %v75 = vperm.slane %v73, 0
    %vm77 = vcmask 523264
    %v79 = vsel %vm77, %v64, 0
    %81 = vmatpush.msra.mxu0 0.0
    %82 = vmatpush.msra.mxu0 0.0
    %83 = vmatpush.msra.mxu0 0.0
    %84 = vmatpush.msra.mxu0 0.0
    %85 = vmatpush.msra.mxu0 0.0
    %86 = vmatpush.msra.mxu0 0.0
    %87 = vmatpush.msra.mxu0 0.0
    %88 = vmatpush.msra.mxu0 0.0
    %89 = vmatpush.msra.mxu0 %v72
    %90 = vmatpush.msra.mxu0 %v71
    %91 = vmatpush.msra.mxu0 %v70
    %92 = vmatpush.msra.mxu0 %v69
    %93 = vmatpush.msra.mxu0 %v68
    %94 = vmatpush.msra.mxu0 %v67
    %95 = vmatpush.msra.mxu0 %v66
    %96 = vmatpush.msra.mxu0 %v65
    %97 = vmatmul.f32.gmra.mxu0 %v79
    %v98 = vpop.f32.mrf.mxu0
    %v99 = vadd.f32 %v75, %v98
    %100 = vdwg.mxu0
    %v101 = vtanh.pop %v99
    %v102 = vld [vmem:[%s5] sm:$0xff]
    %v103 = vld [vmem:[%s5 + $0x8] sm:$0xff]
    %v104 = vld [vmem:[%s5 + $0x10] sm:$0xff]
    %v105 = vld [vmem:[%s5 + $0x18] sm:$0xff]
    %v106 = vld [vmem:[%s6] sm:$0x1]
    %v108 = vperm.slane %v106, 0
    %vm110 = vcmask 261120
    %v112 = vsel %vm110, %v101, 0
    %114 = vmatpush.msra.mxu0 0.0
    %115 = vmatpush.msra.mxu0 0.0
    %116 = vmatpush.msra.mxu0 0.0
    %117 = vmatpush.msra.mxu0 0.0
    %118 = vmatpush.msra.mxu0 0.0
    %119 = vmatpush.msra.mxu0 0.0
    %120 = vmatpush.msra.mxu0 0.0
    %121 = vmatpush.msra.mxu0 0.0
    %122 = vmatpush.msra.mxu0 0.0
    %123 = vmatpush.msra.mxu0 0.0
    %124 = vmatpush.msra.mxu0 0.0
    %125 = vmatpush.msra.mxu0 0.0
    %126 = vmatpush.msra.mxu0 %v105
    %127 = vmatpush.msra.mxu0 %v104
    %128 = vmatpush.msra.mxu0 %v103
    %129 = vmatpush.msra.mxu0 %v102
    %130 = vmatmul.f32.gmra.mxu0 %v112
    %v131 = vpop.f32.mrf.mxu0
    %v132 = vadd.f32 %v108, %v131
    %133 = vdwg.mxu0
    %v134 = vtanh.pop %v132
    %v135 = vld [vmem:[%s7] sm:$0xff]
    %v136 = vld [vmem:[%s7 + $0x8] sm:$0xff]
    %v137 = vld [vmem:[%s7 + $0x10] sm:$0xff]
    %v138 = vld [vmem:[%s7 + $0x18] sm:$0xff]
    %v139 = vld [vmem:[%s8] sm:$0x1]
    %v141 = vperm.slane %v139, 0
    %v144 = vsel %vm110, %v134, 0
    %146 = vmatpush.msra.mxu0 0.0
    %147 = vmatpush.msra.mxu0 0.0
    %148 = vmatpush.msra.mxu0 0.0
    %149 = vmatpush.msra.mxu0 0.0
    %150 = vmatpush.msra.mxu0 0.0
    %151 = vmatpush.msra.mxu0 0.0
    %152 = vmatpush.msra.mxu0 0.0
    %153 = vmatpush.msra.mxu0 0.0
    %154 = vmatpush.msra.mxu0 0.0
    %155 = vmatpush.msra.mxu0 0.0
    %156 = vmatpush.msra.mxu0 0.0
    %157 = vmatpush.msra.mxu0 0.0
    %158 = vmatpush.msra.mxu0 %v138
    %159 = vmatpush.msra.mxu0 %v137
    %160 = vmatpush.msra.mxu0 %v136
    %161 = vmatpush.msra.mxu0 %v135
    %162 = vmatmul.f32.gmra.mxu0 %v144
    %v163 = vpop.f32.mrf.mxu0
    %v164 = vadd.f32 %v141, %v163
    %165 = vdwg.mxu0
    %166 = vmax.xlane.f32.xlu0 %v164
    %v167 = vpop.xlane.xlu0 %166
    %v168 = vsub.f32 %v164, %v167
    %v169 = vmul.f32 %v168, 1.442695
    %v170 = vpow.pop %v169
    %171 = vadd.xlane.f32.xlu0 %v170
    %v172 = vpop.xlane.xlu0 %171
    %v173 = vrcp.pop %v172
    %v174 = vmul.f32 %v172, %v173
    %v175 = vsub.f32 1.0, %v174
    %v176 = vmul.f32 %v173, %v175
    %v177 = vadd.f32 %v173, %v176
    %vm178 = vweird.f32 %v172
    %vm179 = vweird.f32 %v173
    %vm180 = vmor %vm178, %vm179
    %v181 = vsel %vm180, %v173, %v177
    %v182 = vand.u32 2147483647, %v172
    %vm183 = vcmp.eq.f32.partialorder %v182, 8.507059e+37
    %v184 = vand.u32 %v172, 2147483648
    %v185 = vor.u32 1.1754944e-38, %v184
    %v186 = vsel %vm183, %v185, %v181
    %v187 = vmul.f32 %v170, %v186
    %vm188 = vcmask 48128
    %189 = vst.msk [vmem:[#allocation2] sm:$0xff] %vm188, %v187
    // Predicated region
    $region38: #{actor_discrete_forward.1} parent=1 // pred_check
      _
    $region39: #{actor_discrete_forward.1} parent=1 // pred_check_branch
      %191 = sbr.rel (0) target = $region41
    $region40: #{actor_discrete_forward.1} parent=1 // pred_region
      %193 = vsyncadd [#allocation3], 0
      %s195 = sshll.u32 [#allocation2], 4
      %s196 = int_to_ptr.vmem [resolvable:$true] %s195
      %s197 = sshll.u32 %s9, 4
      %s198 = int_to_ptr.hbm [resolvable:$true] %s197
      %200 = dma.vmem_to_hbm [thread:$0]  %s196, 128, %s198, [#allocation3]
    $region41: #{actor_discrete_forward.1} parent=1 // pred_fallthru
      _
    // Predicated region
    $region42: #{actor_discrete_forward.1} parent=1 // pred_check
      _
    $region43: #{actor_discrete_forward.1} parent=1 // pred_check_branch
      %202 = sbr.rel (0) target = $region45
    $region44: #{actor_discrete_forward.1} parent=1 // pred_region
      %204 = dma.done [#allocation3], 128
    $region45: #{actor_discrete_forward.1} parent=1 // pred_fallthru
      _
    %205 = vsyncpa [#allocation3], 1

</llo_original>
